<compile_context>
chip_gen: v7x
topology: tpu7x:2x2x1
jax: 0.10.0
libtpu: 0.0.40
codegen_flags: <defaults>
</compile_context>

<pallas_src>
import jax
import jax.numpy as jnp
from jax.experimental import pallas as pl
from jax.experimental.pallas import tpu as pltpu


def attention_kernel(hidden_ref, enc_ref, mask_ref, wh_ref, we_ref, b_ref,
                     v_ref, out_ref):
    S, TB, H = enc_ref.shape            # enc stays in native [S, tile_B, H]
    hidden = hidden_ref[...]            # [tile_B, H]  f32
    mask = mask_ref[...]                # [tile_B, S]  f32 (1.0 = valid)

    # --- MXU matmuls: bf16 operands, f32 accumulation -----------------------
    h_bf = hidden.astype(jnp.bfloat16)
    wh_bf = wh_ref[...].astype(jnp.bfloat16)
    we_bf = we_ref[...].astype(jnp.bfloat16)
    # Flattening leading dims of [S, tile_B, H] is layout-cheap (no HBM move).
    e_bf = enc_ref[...].reshape(S * TB, H).astype(jnp.bfloat16)

    # S-invariant hidden projection: computed once per batch tile.
    h_proj = jnp.dot(h_bf, wh_bf, preferred_element_type=jnp.float32)   # [tile_B, H]
    e_proj = jnp.dot(e_bf, we_bf,
                     preferred_element_type=jnp.float32).reshape(S, TB, H)

    # energy = tanh(cat(hidden, enc) @ W + b), split into the two halves of W.
    energy = jnp.tanh(e_proj + h_proj[None, :, :] + b_ref[...][None, :, :])  # [S, tile_B, H]

    # --- v-projection as VPU multiply + lane reduction (no N=1 MXU matmul) --
    v_row = v_ref[...]                                    # [1, H]
    score_sb = jnp.sum(energy * v_row[None, :, :], axis=-1)   # [S, tile_B]

    # Tiny in-kernel transpose so the output block is [tile_B, S] with S on
    # the lane axis (lane-dense stores at production S).
    score = score_sb.T                                    # [tile_B, S]

    # masked_fill(attn_mask == 0, -1e6) then softmax over S (f32 math).
    score = jnp.where(mask > 0.5, score, jnp.float32(-1e6))
    m = jnp.max(score, axis=-1, keepdims=True)
    e = jnp.exp(score - m)
    out_ref[...] = e / jnp.sum(e, axis=-1, keepdims=True)


def attention_forward(hidden, encoder_outputs, attn_mask, wh, we, b, v):
    """hidden: [1, B, H], encoder_outputs: [S, B, H] (native layout, NOT
    transposed), attn_mask: [B, S] -> attention weights [B, S]."""
    S, B, H = encoder_outputs.shape
    hidden_bh = hidden.reshape(B, H)          # free reshape of [1, B, H]
    v_row = v.reshape(1, H)                   # tiny
    attn_mask = attn_mask.astype(jnp.float32)

    # Batch tile: multiple of 8 when possible (sublane rule), else full B.
    if B % 8 == 0:
        tile_b = min(B, 64)
        while B % tile_b:
            tile_b -= 8
    else:
        tile_b = B
    grid = (B // tile_b,)

    in_specs = [
        pl.BlockSpec((tile_b, H), lambda i: (i, 0)),          # hidden
        pl.BlockSpec((S, tile_b, H), lambda i: (0, i, 0)),    # encoder outputs
        pl.BlockSpec((tile_b, S), lambda i: (i, 0)),          # attn mask
        pl.BlockSpec((H, H), lambda i: (0, 0)),               # wh (resident)
        pl.BlockSpec((H, H), lambda i: (0, 0)),               # we (resident)
        pl.BlockSpec((1, H), lambda i: (0, 0)),               # bias (resident)
        pl.BlockSpec((1, H), lambda i: (0, 0)),               # v (resident)
    ]
    out_spec = pl.BlockSpec((tile_b, S), lambda i: (i, 0))

    return pl.pallas_call(
        attention_kernel,
        out_shape=jax.ShapeDtypeStruct((B, S), jnp.float32),
        grid=grid,
        in_specs=in_specs,
        out_specs=out_spec,
        compiler_params=pltpu.CompilerParams(
            dimension_semantics=("parallel",),      # shard B across TCs (v7x)
            vmem_limit_bytes=32 * 1024 * 1024,      # explicit; safe on 64MiB v7x
        ),
    )(hidden_bh, encoder_outputs, attn_mask, wh, we, b, v_row)


def reference_forward_bf16(hidden, encoder_outputs, attn_mask, wh, we, b, v):
    """Pure-JAX replica mirroring the kernel's bf16-matmul / f32-elementwise math."""
    S, B, H = encoder_outputs.shape
    bf = jnp.bfloat16
    h = hidden.reshape(B, H)
    h_proj = jnp.dot(h.astype(bf), wh.astype(bf),
                     preferred_element_type=jnp.float32)                 # [B, H]
    e_proj = jnp.einsum('sbh,hk->sbk', encoder_outputs.astype(bf),
                        we.astype(bf), preferred_element_type=jnp.float32)
    energy = jnp.tanh(e_proj + h_proj[None, :, :] + b[None, :, :])       # [S, B, H]
    score = jnp.sum(energy * v.reshape(1, 1, H), axis=-1).T              # [B, S]
    score = jnp.where(attn_mask > 0.5, score, -1e6)
    return jax.nn.softmax(score, axis=1)


def reference_forward_f32(hidden, encoder_outputs, attn_mask, wh, we, b, v):
    """PyTorch-faithful f32 reference (concat formulation of the Attention module)."""
    S, B, H = encoder_outputs.shape
    h = jnp.transpose(jnp.repeat(hidden, S, axis=0), (1, 0, 2))          # [B, S, H]
    e = jnp.transpose(encoder_outputs, (1, 0, 2))                        # [B, S, H]
    cat = jnp.concatenate([h, e], axis=2)                                # [B, S, 2H]
    W = jnp.concatenate([wh, we], axis=0)                                # [2H, H]
    energy = jnp.tanh(cat @ W + b[0])
    att = (energy @ v)[..., 0]
    att = jnp.where(attn_mask == 0, -1e6, att)
    return jax.nn.softmax(att, axis=1)


if __name__ == "__main__":
    B, S, H = 2, 8, 32   # toy shapes; at this size the op is pure launch
                         # overhead — in production it should be fused/batched.

    key = jax.random.PRNGKey(0)
    k_hid, k_enc, k_mask, k_wa, k_ba, k_v = jax.random.split(key, 6)

    # Inputs (PyTorch conventions: hidden [1, B, H], encoder_outputs [S, B, H]).
    hidden = jax.random.normal(k_hid, (1, B, H), dtype=jnp.float32)
    encoder_outputs = jax.random.normal(k_enc, (S, B, H), dtype=jnp.float32)
    attn_mask = jax.random.bernoulli(k_mask, 0.7, (B, S)).astype(jnp.float32)
    attn_mask = attn_mask.at[:, 0].set(1.0)  # keep at least one valid position

    # Parameters. nn.Linear(2H, H): weight [H, 2H]; stored transposed [2H, H]
    # and split into the hidden-half (wh) and encoder-half (we).
    W_attn = 0.1 * jax.random.normal(k_wa, (2 * H, H), dtype=jnp.float32)
    wh = W_attn[:H]
    we = W_attn[H:]
    b_attn = 0.1 * jax.random.normal(k_ba, (1, H), dtype=jnp.float32)
    # nn.Linear(H, 1, bias=False): weight [1, H]; stored as v = weight.T -> [H, 1].
    v_w = 0.1 * jax.random.normal(k_v, (H, 1), dtype=jnp.float32)

    out = attention_forward(hidden, encoder_outputs, attn_mask, wh, we, b_attn, v_w)
    out = jax.block_until_ready(out)

    ref_bf16 = reference_forward_bf16(hidden, encoder_outputs, attn_mask,
                                      wh, we, b_attn, v_w)
    ref_f32 = reference_forward_f32(hidden, encoder_outputs, attn_mask,
                                    wh, we, b_attn, v_w)

    assert out.shape == (B, S)
    assert jnp.allclose(out, ref_bf16, atol=1e-3, rtol=1e-3), (out, ref_bf16)
    assert jnp.allclose(out, ref_f32, atol=2e-2, rtol=2e-2), (out, ref_f32)

    print("KERNEL_OK")
</pallas_src>

<mosaic_0001>
module attributes {stable_mosaic.version = 11 : i64} {
  func.func @attention_kernel(%arg0: i32, %arg1: memref<2x32xf32, #tpu.memory_space<vmem>>, %arg2: memref<8x2x32xf32, #tpu.memory_space<vmem>>, %arg3: memref<2x8xf32, #tpu.memory_space<vmem>>, %arg4: memref<32x32xf32, #tpu.memory_space<vmem>>, %arg5: memref<32x32xf32, #tpu.memory_space<vmem>>, %arg6: memref<1x32xf32, #tpu.memory_space<vmem>>, %arg7: memref<1x32xf32, #tpu.memory_space<vmem>>, %arg8: memref<2x8xf32, #tpu.memory_space<vmem>>) attributes {dimension_semantics = [#tpu.dimension_semantics<parallel>], iteration_bounds = array<i64: 1>, scalar_prefetch = 0 : i64, scratch_operands = 0 : i64, tpu.core_type = #tpu.core_type<tc>, window_params = [{transform_indices = @transform_0, window_bounds = array<i64: 2, 32>}, {transform_indices = @transform_1, window_bounds = array<i64: 8, 2, 32>}, {transform_indices = @transform_2, window_bounds = array<i64: 2, 8>}, {pipeline_mode = #tpu.pipeline_mode<synchronous>, transform_indices = @transform_3, window_bounds = array<i64: 32, 32>}, {pipeline_mode = #tpu.pipeline_mode<synchronous>, transform_indices = @transform_4, window_bounds = array<i64: 32, 32>}, {pipeline_mode = #tpu.pipeline_mode<synchronous>, transform_indices = @transform_5, window_bounds = array<i64: 1, 32>}, {pipeline_mode = #tpu.pipeline_mode<synchronous>, transform_indices = @transform_6, window_bounds = array<i64: 1, 32>}, {transform_indices = @transform_7, window_bounds = array<i64: 2, 8>}]} {
    %c0 = arith.constant 0 : index
    %c0_0 = arith.constant 0 : index
    %0 = vector.load %arg1[%c0, %c0_0] : memref<2x32xf32, #tpu.memory_space<vmem>>, vector<2x32xf32>
    %c0_1 = arith.constant 0 : index
    %c0_2 = arith.constant 0 : index
    %1 = vector.load %arg3[%c0_1, %c0_2] : memref<2x8xf32, #tpu.memory_space<vmem>>, vector<2x8xf32>
    %2 = arith.truncf %0 : vector<2x32xf32> to vector<2x32xbf16>
    %c0_3 = arith.constant 0 : index
    %c0_4 = arith.constant 0 : index
    %3 = vector.load %arg4[%c0_3, %c0_4] : memref<32x32xf32, #tpu.memory_space<vmem>>, vector<32x32xf32>
    %4 = arith.truncf %3 : vector<32x32xf32> to vector<32x32xbf16>
    %c0_5 = arith.constant 0 : index
    %c0_6 = arith.constant 0 : index
    %5 = vector.load %arg5[%c0_5, %c0_6] : memref<32x32xf32, #tpu.memory_space<vmem>>, vector<32x32xf32>
    %6 = arith.truncf %5 : vector<32x32xf32> to vector<32x32xbf16>
    %c0_7 = arith.constant 0 : index
    %c0_8 = arith.constant 0 : index
    %c0_9 = arith.constant 0 : index
    %7 = vector.load %arg2[%c0_7, %c0_8, %c0_9] : memref<8x2x32xf32, #tpu.memory_space<vmem>>, vector<8x2x32xf32>
    %8 = vector.shape_cast %7 : vector<8x2x32xf32> to vector<16x32xf32>
    %9 = arith.truncf %8 : vector<16x32xf32> to vector<16x32xbf16>
    %cst = arith.constant dense<0.000000e+00> : vector<2x32xf32>
    %10 = tpu.matmul %2, %4, %cst {dimension_numbers = #tpu.dot_dimension_numbers<[1], [0], [0], [1], [0, 0, 1, 1], [], []>} : vector<2x32xbf16>, vector<32x32xbf16>, vector<2x32xf32> -> vector<2x32xf32>
    %cst_10 = arith.constant dense<0.000000e+00> : vector<16x32xf32>
    %11 = tpu.matmul %9, %6, %cst_10 {dimension_numbers = #tpu.dot_dimension_numbers<[1], [0], [0], [1], [0, 0, 1, 1], [], []>} : vector<16x32xbf16>, vector<32x32xbf16>, vector<16x32xf32> -> vector<16x32xf32>
    %12 = vector.shape_cast %11 : vector<16x32xf32> to vector<8x2x32xf32>
    %13 = vector.shape_cast %10 : vector<2x32xf32> to vector<1x2x32xf32>
    %14 = vector.broadcast %13 : vector<1x2x32xf32> to vector<8x2x32xf32>
    %15 = arith.addf %12, %14 : vector<8x2x32xf32>
    %c0_11 = arith.constant 0 : index
    %c0_12 = arith.constant 0 : index
    %16 = vector.load %arg6[%c0_11, %c0_12] : memref<1x32xf32, #tpu.memory_space<vmem>>, vector<1x32xf32>
    %17 = vector.shape_cast %16 : vector<1x32xf32> to vector<1x1x32xf32>
    %18 = vector.broadcast %17 : vector<1x1x32xf32> to vector<8x2x32xf32>
    %19 = arith.addf %15, %18 : vector<8x2x32xf32>
    %20 = math.tanh %19 : vector<8x2x32xf32>
    %c0_13 = arith.constant 0 : index
    %c0_14 = arith.constant 0 : index
    %21 = vector.load %arg7[%c0_13, %c0_14] : memref<1x32xf32, #tpu.memory_space<vmem>>, vector<1x32xf32>
    %22 = vector.shape_cast %21 : vector<1x32xf32> to vector<1x1x32xf32>
    %23 = vector.broadcast %22 : vector<1x1x32xf32> to vector<8x2x32xf32>
    %24 = arith.mulf %20, %23 : vector<8x2x32xf32>
    %cst_15 = arith.constant dense<0.000000e+00> : vector<8x2xf32>
    %25 = vector.multi_reduction <add>, %24, %cst_15 [2] : vector<8x2x32xf32> to vector<8x2xf32>
    %26 = tpu.transpose %25, [1, 0] : vector<8x2xf32> -> vector<2x8xf32>
    %cst_16 = arith.constant 5.000000e-01 : f32
    %27 = vector.broadcast %cst_16 : f32 to vector<2x8xf32>
    %28 = arith.cmpf ogt, %1, %27 : vector<2x8xf32>
    %cst_17 = arith.constant -1.000000e+06 : f32
    %29 = vector.broadcast %cst_17 : f32 to vector<2x8xf32>
    %30 = arith.select %28, %26, %29 : vector<2x8xi1>, vector<2x8xf32>
    %cst_18 = arith.constant dense<0xFF800000> : vector<2xf32>
    %31 = vector.multi_reduction <maximumf>, %30, %cst_18 [1] : vector<2x8xf32> to vector<2xf32>
    %32 = vector.shape_cast %31 : vector<2xf32> to vector<2x1xf32>
    %33 = vector.broadcast %32 : vector<2x1xf32> to vector<2x8xf32>
    %34 = arith.subf %30, %33 : vector<2x8xf32>
    %35 = math.exp %34 : vector<2x8xf32>
    %cst_19 = arith.constant dense<0.000000e+00> : vector<2xf32>
    %36 = vector.multi_reduction <add>, %35, %cst_19 [1] : vector<2x8xf32> to vector<2xf32>
    %37 = vector.shape_cast %36 : vector<2xf32> to vector<2x1xf32>
    %38 = vector.broadcast %37 : vector<2x1xf32> to vector<2x8xf32>
    %39 = arith.divf %35, %38 : vector<2x8xf32>
    %c0_20 = arith.constant 0 : index
    %c0_21 = arith.constant 0 : index
    %40 = vector.load %arg8[%c0_20, %c0_21] : memref<2x8xf32, #tpu.memory_space<vmem>>, vector<2x8xf32>
    tpu.vector_store %arg8[%c0_20, %c0_21], %39 {strides = array<i32>} : memref<2x8xf32, #tpu.memory_space<vmem>>, vector<2x8xf32>,
    return
  }
  func.func @transform_0(%arg0: i32) -> (i32, i32) {
    %c0_i32 = arith.constant 0 : i32
    %c0_i32_0 = arith.constant 0 : i32
    return %arg0, %c0_i32 : i32, i32
  }
  func.func @transform_1(%arg0: i32) -> (i32, i32, i32) {
    %c0_i32 = arith.constant 0 : i32
    %c0_i32_0 = arith.constant 0 : i32
    %c0_i32_1 = arith.constant 0 : i32
    return %c0_i32, %arg0, %c0_i32_0 : i32, i32, i32
  }
  func.func @transform_2(%arg0: i32) -> (i32, i32) {
    %c0_i32 = arith.constant 0 : i32
    %c0_i32_0 = arith.constant 0 : i32
    return %arg0, %c0_i32 : i32, i32
  }
  func.func @transform_3(%arg0: i32) -> (i32, i32) {
    %c0_i32 = arith.constant 0 : i32
    %c0_i32_0 = arith.constant 0 : i32
    %c0_i32_1 = arith.constant 0 : i32
    return %c0_i32, %c0_i32_0 : i32, i32
  }
  func.func @transform_4(%arg0: i32) -> (i32, i32) {
    %c0_i32 = arith.constant 0 : i32
    %c0_i32_0 = arith.constant 0 : i32
    %c0_i32_1 = arith.constant 0 : i32
    return %c0_i32, %c0_i32_0 : i32, i32
  }
  func.func @transform_5(%arg0: i32) -> (i32, i32) {
    %c0_i32 = arith.constant 0 : i32
    %c0_i32_0 = arith.constant 0 : i32
    %c0_i32_1 = arith.constant 0 : i32
    return %c0_i32, %c0_i32_0 : i32, i32
  }
  func.func @transform_6(%arg0: i32) -> (i32, i32) {
    %c0_i32 = arith.constant 0 : i32
    %c0_i32_0 = arith.constant 0 : i32
    %c0_i32_1 = arith.constant 0 : i32
    return %c0_i32, %c0_i32_0 : i32, i32
  }
  func.func @transform_7(%arg0: i32) -> (i32, i32) {
    %c0_i32 = arith.constant 0 : i32
    %c0_i32_0 = arith.constant 0 : i32
    return %arg0, %c0_i32 : i32, i32
  }
}

</mosaic_0001>

<llo_original>
// kernel: tpu_custom_call.1
$region0: #{tpu_custom_call.1}
  #allocation0 [shape = 'u32[]', space=smem, size = 0x4, offset = 0x4, fixed_abs, tag = 'smem constant byte address 0x4 - core index']
  #allocation1 [shape = 'u32[144,128]{1,0:T(1,128)}', space=vmem, size = 0x12000, scoped, tag = 'internal scratch']
  %s0 = inlined_call_operand.hbm [shape: f32[2,32], index: 0, kind: input, shape index: {}]
  %s1 = inlined_call_operand.hbm [shape: f32[8,2,32], index: 1, kind: input, shape index: {}]
  %s2 = inlined_call_operand.vmem [shape: f32[2,8], index: 2, kind: input, shape index: {}]
  %s3 = inlined_call_operand.hbm [shape: f32[32,32], index: 3, kind: input, shape index: {}]
  %s4 = inlined_call_operand.hbm [shape: f32[32,32], index: 4, kind: input, shape index: {}]
  %s5 = inlined_call_operand.vmem [shape: f32[1,32], index: 5, kind: input, shape index: {}]
  %s6 = inlined_call_operand.vmem [shape: f32[1,32], index: 6, kind: input, shape index: {}]
  %s7 = inlined_call_operand.hbm [shape: f32[2,8], index: 7, kind: output, shape index: {}]
  %s8 = sld [smem:[#allocation0]]
  $region54: #{tpu_custom_call.1} parent=0
    _
  %s10 = ssub.s32 1, %s8
  %s11 = scalar_select 0, %s10, %s8
  $region1: #{tpu_custom_call.1} parent=0
    #allocation2 [shape = 'u8[1024]{0}', space=vmem, size = 0x400, scoped, tag = 'input window, operand 0, single buffered']
    #allocation3 [shape = 's32[1]{0}', space=sflag, size = 0x4, scoped, tag = 'scoped memory for tpu_custom_call.1']
    #allocation4 [shape = 's32[1]{0}', space=sflag, size = 0x4, scoped, tag = 'scoped memory for tpu_custom_call.1']
    #allocation5 [shape = 'u8[8192]{0}', space=vmem, size = 0x2000, scoped, tag = 'input window, operand 1, single buffered']
    #allocation6 [shape = 's32[1]{0}', space=sflag, size = 0x4, scoped, tag = 'scoped memory for tpu_custom_call.1']
    #allocation7 [shape = 'u8[16384]{0}', space=vmem, size = 0x4000, scoped, tag = 'input window, operand 3, single buffered']
    #allocation8 [shape = 'u8[16384]{0}', space=vmem, size = 0x4000, scoped, tag = 'input window, operand 4, single buffered']
    #allocation9 [shape = 's32[1]{0}', space=sflag, size = 0x4, scoped, tag = 'scoped memory for tpu_custom_call.1']
    #allocation10 [shape = 'u8[1024]{0}', space=vmem, size = 0x400, scoped, tag = 'output window, operand 0, single buffered']
    %12 = vsyncpa [#allocation3], 0
    %13 = vsyncpa [#allocation6], 0
    %14 = vsyncpa [#allocation9], 0
    %15 = vsyncpa [#allocation4], 0
    // Predicated region
    $region2: #{tpu_custom_call.1} parent=1 // pred_check
      _
    $region3: #{tpu_custom_call.1} parent=1 // pred_check_branch
      %17 = sbr.rel (0) target = $region5
    $region4: #{tpu_custom_call.1} parent=1 // pred_region
      %s19 = ssub.s32 32, 32
      %20 = vsyncadd [#allocation3], %s19
      %s22 = sshll.u32 [#allocation2], 4
      %s23 = int_to_ptr.vmem [resolvable:$true] %s22
      %25 = dma.hbm_to_vmem [thread:$0]  %s0, 32, %s23, [#allocation3]
    $region5: #{tpu_custom_call.1} parent=1 // pred_fallthru
      _
    // Predicated region
    $region6: #{tpu_custom_call.1} parent=1 // pred_check
      _
    $region7: #{tpu_custom_call.1} parent=1 // pred_check_branch
      %27 = sbr.rel (0) target = $region9
    $region8: #{tpu_custom_call.1} parent=1 // pred_region
      %s29 = ssub.s32 256, 256
      %30 = vsyncadd [#allocation6], %s29
      %s31 = sshll.u32 [#allocation5], 4
      %s32 = int_to_ptr.vmem [resolvable:$true] %s31
      %37 = dma.hbm_to_vmem [thread:$0]  %s1, 256, %s32, [#allocation6], 32, 32, 2
    $region9: #{tpu_custom_call.1} parent=1 // pred_fallthru
      _
    // Predicated region
    $region10: #{tpu_custom_call.1} parent=1 // pred_check
      _
    $region11: #{tpu_custom_call.1} parent=1 // pred_check_branch
      %39 = sbr.rel (0) target = $region13
    $region12: #{tpu_custom_call.1} parent=1 // pred_region
      _
    $region13: #{tpu_custom_call.1} parent=1 // pred_fallthru
      _
    // Predicated region
    $region14: #{tpu_custom_call.1} parent=1 // pred_check
      _
    $region15: #{tpu_custom_call.1} parent=1 // pred_check_branch
      %41 = sbr.rel (0) target = $region17
    $region16: #{tpu_custom_call.1} parent=1 // pred_region
      %s43 = ssub.s32 512, 512
      %44 = vsyncadd [#allocation6], %s43
      %s45 = sshll.u32 [#allocation7], 4
      %s46 = int_to_ptr.vmem [resolvable:$true] %s45
      %51 = dma.hbm_to_vmem [thread:$0]  %s3, 512, %s46, [#allocation6], 128, 128, 8
    $region17: #{tpu_custom_call.1} parent=1 // pred_fallthru
      _
    // Predicated region
    $region18: #{tpu_custom_call.1} parent=1 // pred_check
      _
    $region19: #{tpu_custom_call.1} parent=1 // pred_check_branch
      %53 = sbr.rel (0) target = $region21
    $region20: #{tpu_custom_call.1} parent=1 // pred_region
      %s55 = ssub.s32 512, 512
      %56 = vsyncadd [#allocation9], %s55
      %s57 = sshll.u32 [#allocation8], 4
      %s58 = int_to_ptr.vmem [resolvable:$true] %s57
      %63 = dma.hbm_to_vmem [thread:$0]  %s4, 512, %s58, [#allocation9], 128, 128, 8
    $region21: #{tpu_custom_call.1} parent=1 // pred_fallthru
      _
    // Predicated region
    $region22: #{tpu_custom_call.1} parent=1 // pred_check
      _
    $region23: #{tpu_custom_call.1} parent=1 // pred_check_branch
      %65 = sbr.rel (0) target = $region25
    $region24: #{tpu_custom_call.1} parent=1 // pred_region
      _
    $region25: #{tpu_custom_call.1} parent=1 // pred_fallthru
      _
    // Predicated region
    $region26: #{tpu_custom_call.1} parent=1 // pred_check
      _
    $region27: #{tpu_custom_call.1} parent=1 // pred_check_branch
      %67 = sbr.rel (0) target = $region29
    $region28: #{tpu_custom_call.1} parent=1 // pred_region
      _
    $region29: #{tpu_custom_call.1} parent=1 // pred_fallthru
      _
    // Predicated region
    $region30: #{tpu_custom_call.1} parent=1 // pred_check
      _
    $region31: #{tpu_custom_call.1} parent=1 // pred_check_branch
      %69 = sbr.rel (0) target = $region33
    $region32: #{tpu_custom_call.1} parent=1 // pred_region
      %70 = dma.done [#allocation3], 32
    $region33: #{tpu_custom_call.1} parent=1 // pred_fallthru
      _
    // Predicated region
    $region34: #{tpu_custom_call.1} parent=1 // pred_check
      _
    $region35: #{tpu_custom_call.1} parent=1 // pred_check_branch
      %72 = sbr.rel (0) target = $region37
    $region36: #{tpu_custom_call.1} parent=1 // pred_region
      %73 = dma.done [#allocation6], 256
    $region37: #{tpu_custom_call.1} parent=1 // pred_fallthru
      _
    // Predicated region
    $region38: #{tpu_custom_call.1} parent=1 // pred_check
      _
    $region39: #{tpu_custom_call.1} parent=1 // pred_check_branch
      %75 = sbr.rel (0) target = $region41
    $region40: #{tpu_custom_call.1} parent=1 // pred_region
      %76 = dma.done [#allocation6], 512
    $region41: #{tpu_custom_call.1} parent=1 // pred_fallthru
      _
    // Predicated region
    $region42: #{tpu_custom_call.1} parent=1 // pred_check
      _
    $region43: #{tpu_custom_call.1} parent=1 // pred_check_branch
      %78 = sbr.rel (0) target = $region45
    $region44: #{tpu_custom_call.1} parent=1 // pred_region
      %79 = dma.done [#allocation9], 512
    $region45: #{tpu_custom_call.1} parent=1 // pred_fallthru
      _
    %v81 = vld [vmem:[#allocation2] sm:$0x3]
    %v82 = vld [vmem:[%s2] sm:$0x3]
    %v83 = vpack.c.bf16 %v81, %v81
    %v84 = vld [vmem:[#allocation7] sm:$0xff]
    %v85 = vld [vmem:[#allocation7 + $0x8] sm:$0xff]
    %v86 = vld [vmem:[#allocation7 + $0x10] sm:$0xff]
    %v87 = vld [vmem:[#allocation7 + $0x18] sm:$0xff]
    %v88 = vpack.c.bf16 %v85, %v84
    %v89 = vpack.c.bf16 %v87, %v86
    %v90 = vld [vmem:[#allocation8] sm:$0xff]
    %v91 = vld [vmem:[#allocation8 + $0x8] sm:$0xff]
    %v92 = vld [vmem:[#allocation8 + $0x10] sm:$0xff]
    %v93 = vld [vmem:[#allocation8 + $0x18] sm:$0xff]
    %v94 = vpack.c.bf16 %v91, %v90
    %v95 = vpack.c.bf16 %v93, %v92
    %v96 = vld [vmem:[#allocation5] sm:$0x3]
    %v97 = vld [vmem:[#allocation5 + $0x2] sm:$0x3]
    %v98 = vld [vmem:[#allocation5 + $0x4] sm:$0x3]
    %v99 = vld [vmem:[#allocation5 + $0x6] sm:$0x3]
    %v100 = vld [vmem:[#allocation5 + $0x8] sm:$0x3]
    %v101 = vld [vmem:[#allocation5 + $0xa] sm:$0x3]
    %v102 = vld [vmem:[#allocation5 + $0xc] sm:$0x3]
    %v103 = vld [vmem:[#allocation5 + $0xe] sm:$0x3]
    %v112 = vcombine.low %v96, %v97
    %v113 = vcombine.low %v98, %v99
    %v115 = vunpack.c.l.s4 1983009808
    %v116 = vunpack.c.0.s8 %v115
    %v117 = vlaneseq
    %v118 = vshrl.u32 %v117, 7
    %v119 = vsub.s32 %v116, %v118
    %v120 = vrot.slane %v112, %v119
    %v122 = vunpack.c.l.s4 1983009808
    %v123 = vunpack.c.0.s8 %v122
    %v124 = vlaneseq
    %v125 = vshrl.u32 %v124, 7
    %v126 = vsub.s32 %v123, %v125
    %v127 = vrot.slane %v113, %v126
    %v128 = vcombine.low %v120, %v127
    %v129 = vcombine.low %v100, %v101
    %v130 = vcombine.low %v102, %v103
    %v132 = vunpack.c.l.s4 1983009808
    %v133 = vunpack.c.0.s8 %v132
    %v134 = vlaneseq
    %v135 = vshrl.u32 %v134, 7
    %v136 = vsub.s32 %v133, %v135
    %v137 = vrot.slane %v129, %v136
    %v139 = vunpack.c.l.s4 1983009808
    %v140 = vunpack.c.0.s8 %v139
    %v141 = vlaneseq
    %v142 = vshrl.u32 %v141, 7
    %v143 = vsub.s32 %v140, %v142
    %v144 = vrot.slane %v130, %v143
    %v145 = vcombine.low %v137, %v144
    %v148 = vpack.c.bf16 %v145, %v128
    %vm149 = vcmask 261120
    %v151 = vsel %vm149, %v83, 0
    %153 = vmatprep.subr.bf16.mxu0 0
    %154 = vmatpush1.bf16.msra.mxu0 %v88
    %155 = vmatprep.subr.bf16.mxu0 0
    %156 = vmatpush1.bf16.msra.mxu0 %v89
    %157 = vmatprep.subr.bf16.mxu0 0
    %158 = vmatpush1.bf16.msra.mxu0 0
    %159 = vmatprep.subr.bf16.mxu0 0
    %160 = vmatpush1.bf16.msra.mxu0 0
    %161 = vmatprep.subr.bf16.mxu0 0
    %162 = vmatpush1.bf16.msra.mxu0 0
    %163 = vmatprep.subr.bf16.mxu0 0
    %164 = vmatpush1.bf16.msra.mxu0 0
    %165 = vmatprep.subr.bf16.mxu0 0
    %166 = vmatpush1.bf16.msra.mxu0 0
    %167 = vmatprep.subr.bf16.mxu0 0
    %168 = vmatpush1.bf16.msra.mxu0 0
    %169 = vmatprep.subr.bf16.mxu0 0
    %170 = vmatpush1.bf16.msra.mxu0 0
    %171 = vmatprep.subr.bf16.mxu0 0
    %172 = vmatpush1.bf16.msra.mxu0 0
    %173 = vmatprep.subr.bf16.mxu0 0
    %174 = vmatpush1.bf16.msra.mxu0 0
    %175 = vmatprep.subr.bf16.mxu0 0
    %176 = vmatpush1.bf16.msra.mxu0 0
    %177 = vmatprep.subr.bf16.mxu0 0
    %178 = vmatpush1.bf16.msra.mxu0 0
    %179 = vmatprep.subr.bf16.mxu0 0
    %180 = vmatpush1.bf16.msra.mxu0 0
    %181 = vmatprep.subr.bf16.mxu0 0
    %182 = vmatpush1.bf16.msra.mxu0 0
    %183 = vmatprep.subr.bf16.mxu0 0
    %184 = vmatpush1.bf16.msra.mxu0 0
    %185 = vmatprep.mubr.bf16.mxu0 0
    %186 = vmatmul.mubr.bf16.gmra.mrb[0].mxu0 %v151
    %v187 = vpop.f32.mrb[0].mxu0
    %v188 = vadd.f32 0.0, %v187
    %v189 = vpop.f32.mrb[0].mxu0
    %v190 = vpop.f32.mrb[0].mxu0
    %v191 = vpop.f32.mrb[0].mxu0
    %192 = vdwg.mxu0
    %v194 = vsel %vm149, %v148, 0
    %196 = vmatprep.subr.bf16.mxu0 0
    %197 = vmatpush1.bf16.msra.mxu0 %v94
    %198 = vmatprep.subr.bf16.mxu0 0
    %199 = vmatpush1.bf16.msra.mxu0 %v95
    %200 = vmatprep.subr.bf16.mxu0 0
    %201 = vmatpush1.bf16.msra.mxu0 0
    %202 = vmatprep.subr.bf16.mxu0 0
    %203 = vmatpush1.bf16.msra.mxu0 0
    %204 = vmatprep.subr.bf16.mxu0 0
    %205 = vmatpush1.bf16.msra.mxu0 0
    %206 = vmatprep.subr.bf16.mxu0 0
    %207 = vmatpush1.bf16.msra.mxu0 0
    %208 = vmatprep.subr.bf16.mxu0 0
    %209 = vmatpush1.bf16.msra.mxu0 0
    %210 = vmatprep.subr.bf16.mxu0 0
    %211 = vmatpush1.bf16.msra.mxu0 0
    %212 = vmatprep.subr.bf16.mxu0 0
    %213 = vmatpush1.bf16.msra.mxu0 0
    %214 = vmatprep.subr.bf16.mxu0 0
    %215 = vmatpush1.bf16.msra.mxu0 0
    %216 = vmatprep.subr.bf16.mxu0 0
    %217 = vmatpush1.bf16.msra.mxu0 0
    %218 = vmatprep.subr.bf16.mxu0 0
    %219 = vmatpush1.bf16.msra.mxu0 0
    %220 = vmatprep.subr.bf16.mxu0 0
    %221 = vmatpush1.bf16.msra.mxu0 0
    %222 = vmatprep.subr.bf16.mxu0 0
    %223 = vmatpush1.bf16.msra.mxu0 0
    %224 = vmatprep.subr.bf16.mxu0 0
    %225 = vmatpush1.bf16.msra.mxu0 0
    %226 = vmatprep.subr.bf16.mxu0 0
    %227 = vmatpush1.bf16.msra.mxu0 0
    %228 = vmatprep.mubr.bf16.mxu0 0
    %229 = vmatmul.mubr.bf16.gmra.mrb[0].mxu0 %v194
    %v230 = vpop.f32.mrb[0].mxu0
    %v231 = vadd.f32 0.0, %v230
    %v232 = vpop.f32.mrb[0].mxu0
    %v233 = vpop.f32.mrb[0].mxu0
    %v234 = vadd.f32 0.0, %v233
    %v235 = vpop.f32.mrb[0].mxu0
    %236 = vdwg.mxu0
    %v239 = vcombine.high %v231, %v231
    %v241 = vunpack.c.l.s4 1983009808
    %v242 = vunpack.c.0.s8 %v241
    %v243 = vlaneseq
    %v244 = vshrl.u32 %v243, 7
    %v245 = vsub.s32 %v242, %v244
    %v246 = vrot.slane %v231, %v245
    %v248 = vunpack.c.l.s4 1983009808
    %v249 = vunpack.c.0.s8 %v248
    %v250 = vlaneseq
    %v251 = vshrl.u32 %v250, 7
    %v252 = vsub.s32 %v249, %v251
    %v253 = vrot.slane %v239, %v252
    %v254 = vcombine.high %v246, %v246
    %v255 = vcombine.high %v253, %v253
    %v256 = vcombine.high %v234, %v234
    %v258 = vunpack.c.l.s4 1983009808
    %v259 = vunpack.c.0.s8 %v258
    %v260 = vlaneseq
    %v261 = vshrl.u32 %v260, 7
    %v262 = vsub.s32 %v259, %v261
    %v263 = vrot.slane %v234, %v262
    %v265 = vunpack.c.l.s4 1983009808
    %v266 = vunpack.c.0.s8 %v265
    %v267 = vlaneseq
    %v268 = vshrl.u32 %v267, 7
    %v269 = vsub.s32 %v266, %v268
    %v270 = vrot.slane %v256, %v269
    %v271 = vcombine.high %v263, %v263
    %v272 = vcombine.high %v270, %v270
    %v281 = vadd.f32 %v246, %v188
    %v282 = vadd.f32 %v254, %v188
    %v283 = vadd.f32 %v253, %v188
    %v284 = vadd.f32 %v255, %v188
    %v285 = vadd.f32 %v263, %v188
    %v286 = vadd.f32 %v271, %v188
    %v287 = vadd.f32 %v270, %v188
    %v288 = vadd.f32 %v272, %v188
    %v289 = vld [vmem:[%s5] sm:$0x1]
    %v291 = vlaneseq
    %v292 = vshrl.u32 %v291, 7
    %v293 = vsub.s32 0, %v292
    %v294 = vrot.slane %v289, %v293
    %v296 = vadd.f32 %v281, %v294
    %v297 = vadd.f32 %v282, %v294
    %v298 = vadd.f32 %v283, %v294
    %v299 = vadd.f32 %v284, %v294
    %v300 = vadd.f32 %v285, %v294
    %v301 = vadd.f32 %v286, %v294
    %v302 = vadd.f32 %v287, %v294
    %v303 = vadd.f32 %v288, %v294
    %v304 = vtanh.pop %v296
    %v305 = vtanh.pop %v297
    %v306 = vtanh.pop %v298
    %v307 = vtanh.pop %v299
    %v308 = vtanh.pop %v300
    %v309 = vtanh.pop %v301
    %v310 = vtanh.pop %v302
    %v311 = vtanh.pop %v303
    %v312 = vld [vmem:[%s6] sm:$0x1]
    %v314 = vlaneseq
    %v315 = vshrl.u32 %v314, 7
    %v316 = vsub.s32 0, %v315
    %v317 = vrot.slane %v312, %v316
    %v319 = vmul.f32 %v304, %v317
    %v320 = vmul.f32 %v305, %v317
    %v321 = vmul.f32 %v306, %v317
    %v322 = vmul.f32 %v307, %v317
    %v323 = vmul.f32 %v308, %v317
    %v324 = vmul.f32 %v309, %v317
    %v325 = vmul.f32 %v310, %v317
    %v326 = vmul.f32 %v311, %v317
    %vm327 = vcmask 254976
    %v328 = vsel %vm327, %v319, 0.0
    %329 = vadd.xlane.f32.xlu0 %v328
    %v330 = vpop.xlane.xlu0 %329
    %v331 = vsel %vm327, %v320, 0.0
    %332 = vadd.xlane.f32.xlu0 %v331
    %v333 = vpop.xlane.xlu0 %332
    %v334 = vsel %vm327, %v321, 0.0
    %335 = vadd.xlane.f32.xlu0 %v334
    %v336 = vpop.xlane.xlu0 %335
    %v337 = vsel %vm327, %v322, 0.0
    %338 = vadd.xlane.f32.xlu0 %v337
    %v339 = vpop.xlane.xlu0 %338
    %v340 = vsel %vm327, %v323, 0.0
    %341 = vadd.xlane.f32.xlu0 %v340
    %v342 = vpop.xlane.xlu0 %341
    %v343 = vsel %vm327, %v324, 0.0
    %344 = vadd.xlane.f32.xlu0 %v343
    %v345 = vpop.xlane.xlu0 %344
    %v346 = vsel %vm327, %v325, 0.0
    %347 = vadd.xlane.f32.xlu0 %v346
    %v348 = vpop.xlane.xlu0 %347
    %v349 = vsel %vm327, %v326, 0.0
    %350 = vadd.xlane.f32.xlu0 %v349
    %v351 = vpop.xlane.xlu0 %350
    %v360 = vlaneseq
    %v361 = vand.u32 %v360, 127
    %v362 = vlaneseq
    %v363 = vshrl.u32 %v362, 7
    %v364 = vsub.s32 %v361, %v363
    %v365 = vrot.slane %v330, %v364
    %v366 = vlaneseq
    %v367 = vshrl.u32 %v366, 7
    %v368 = vsub.s32 %v361, %v367
    %v369 = vrot.slane %v333, %v368
    %v370 = vlaneseq
    %v371 = vshrl.u32 %v370, 7
    %v372 = vsub.s32 %v361, %v371
    %v373 = vrot.slane %v336, %v372
    %v374 = vlaneseq
    %v375 = vshrl.u32 %v374, 7
    %v376 = vsub.s32 %v361, %v375
    %v377 = vrot.slane %v339, %v376
    %v378 = vlaneseq
    %v379 = vshrl.u32 %v378, 7
    %v380 = vsub.s32 %v361, %v379
    %v381 = vrot.slane %v342, %v380
    %v382 = vlaneseq
    %v383 = vshrl.u32 %v382, 7
    %v384 = vsub.s32 %v361, %v383
    %v385 = vrot.slane %v345, %v384
    %v386 = vlaneseq
    %v387 = vshrl.u32 %v386, 7
    %v388 = vsub.s32 %v361, %v387
    %v389 = vrot.slane %v348, %v388
    %v390 = vlaneseq
    %v391 = vshrl.u32 %v390, 7
    %v392 = vsub.s32 %v361, %v391
    %v393 = vrot.slane %v351, %v392
    %vm394 = vcmask 1041409
    %v395 = vsel %vm394, %v369, %v365
    %vm396 = vcmask 1042434
    %v397 = vsel %vm396, %v373, %v395
    %vm398 = vcmask 1043459
    %v399 = vsel %vm398, %v377, %v397
    %vm400 = vcmask 1044484
    %v401 = vsel %vm400, %v381, %v399
    %vm402 = vcmask 1045509
    %v403 = vsel %vm402, %v385, %v401
    %vm404 = vcmask 1046534
    %v405 = vsel %vm404, %v389, %v403
    %vm406 = vcmask 1047559
    %v407 = vsel %vm406, %v393, %v405
    %409 = vxpose.xlu0.b32.start [1/16] %v407, 128
    %410 = vxpose.xlu0.b32.cont [2/16] 0.0, 128
    %411 = vxpose.xlu0.b32.cont [3/16] 0.0, 128
    %412 = vxpose.xlu0.b32.cont [4/16] 0.0, 128
    %413 = vxpose.xlu0.b32.cont [5/16] 0.0, 128
    %414 = vxpose.xlu0.b32.cont [6/16] 0.0, 128
    %415 = vxpose.xlu0.b32.cont [7/16] 0.0, 128
    %416 = vxpose.xlu0.b32.cont [8/16] 0.0, 128
    %417 = vxpose.xlu0.b32.cont [9/16] 0.0, 128
    %418 = vxpose.xlu0.b32.cont [10/16] 0.0, 128
    %419 = vxpose.xlu0.b32.cont [11/16] 0.0, 128
    %420 = vxpose.xlu0.b32.cont [12/16] 0.0, 128
    %421 = vxpose.xlu0.b32.cont [13/16] 0.0, 128
    %422 = vxpose.xlu0.b32.cont [14/16] 0.0, 128
    %423 = vxpose.xlu0.b32.cont [15/16] 0.0, 128
    %424 = vxpose.xlu0.b32.end [16/16] 0.0, 128
    %v425 = vpop.trf.xlu0
    %v426 = vpop.trf.xlu0
    %v427 = vpop.trf.xlu0
    %v428 = vpop.trf.xlu0
    %v429 = vpop.trf.xlu0
    %v430 = vpop.trf.xlu0
    %v431 = vpop.trf.xlu0
    %v432 = vpop.trf.xlu0
    %v433 = vpop.trf.xlu0
    %v434 = vpop.trf.xlu0
    %v435 = vpop.trf.xlu0
    %v436 = vpop.trf.xlu0
    %v437 = vpop.trf.xlu0
    %v438 = vpop.trf.xlu0
    %v439 = vpop.trf.xlu0
    %v440 = vpop.trf.xlu0
    %vm441 = vcmp.gt.f32.partialorder %v82, 0.5
    %v442 = vsel %vm441, %v425, -1000000.0
    %vm443 = vcmask 58368
    %v444 = vsel %vm443, %v442, -inf
    %445 = vmax.xlane.f32.xlu0 %v444
    %v446 = vpop.xlane.xlu0 %445
    %v447 = vsub.f32 %v442, %v446
    %v448 = vmul.f32 %v447, 1.442695
    %v449 = vpow.pop %v448
    %v450 = vsel %vm443, %v449, 0.0
    %451 = vadd.xlane.f32.xlu0 %v450
    %v452 = vpop.xlane.xlu0 %451
    %v453 = vrcp.pop %v452
    %v454 = vmul.f32 %v449, %v453
    %455 = vst.msk [vmem:[#allocation10] sm:$0x3] %vm443, %v454
    // Predicated region
    $region46: #{tpu_custom_call.1} parent=1 // pred_check
      _
    $region47: #{tpu_custom_call.1} parent=1 // pred_check_branch
      %457 = sbr.rel (0) target = $region49
    $region48: #{tpu_custom_call.1} parent=1 // pred_region
      %s459 = ssub.s32 32, 32
      %460 = vsyncadd [#allocation4], %s459
      %s462 = sshll.u32 [#allocation10], 4
      %s463 = int_to_ptr.vmem [resolvable:$true] %s462
      %465 = dma.vmem_to_hbm [thread:$0]  %s463, 32, %s7, [#allocation4]
    $region49: #{tpu_custom_call.1} parent=1 // pred_fallthru
      _
    // Predicated region
    $region50: #{tpu_custom_call.1} parent=1 // pred_check
      _
    $region51: #{tpu_custom_call.1} parent=1 // pred_check_branch
      %467 = sbr.rel (0) target = $region53
    $region52: #{tpu_custom_call.1} parent=1 // pred_region
      %468 = dma.done [#allocation4], 32
    $region53: #{tpu_custom_call.1} parent=1 // pred_fallthru
      _
    %469 = vsyncpa [#allocation3], 1
    %470 = vsyncpa [#allocation6], 1
    %471 = vsyncpa [#allocation9], 1
    %472 = vsyncpa [#allocation4], 1

</llo_original>
